<compile_context>
chip_gen: v7x
topology: tpu7x:2x2x1
jax: 0.10.0
libtpu: 0.0.40
codegen_flags: <defaults>
</compile_context>

<pallas_src>
import jax
import jax.numpy as jnp
from jax.experimental import pallas as pl
from jax.experimental.pallas import tpu as pltpu


def _mlp_predictor_kernel(hs_ref, hd_ref, w1a_ref, w1b_ref, b1_ref,
                          w2_ref, b2_ref, w3_ref, b3_ref, out_ref):
    # hs/hd: (TE, H)   w1a/w1b: (H, H)   b1: (1, H)
    # w2:    (H, H//2) b2: (1, H//2)
    # w3:    (1, H//2) b3: (1, 1)        out: (1, TE)
    z1 = (jnp.dot(hs_ref[...], w1a_ref[...], preferred_element_type=jnp.float32)
          + jnp.dot(hd_ref[...], w1b_ref[...], preferred_element_type=jnp.float32)
          + b1_ref[...])
    z1 = jnp.maximum(z1, 0.0)

    z2 = jnp.dot(z1, w2_ref[...], preferred_element_type=jnp.float32) + b2_ref[...]
    z2 = jnp.maximum(z2, 0.0)

    # Final layer (out_features == 1): contract z2's H//2 features against W3's
    # single row -> lane-dense (1, TE) row of scores (unmasked full-lane store).
    z3 = jax.lax.dot_general(
        w3_ref[...], z2,
        dimension_numbers=(((1,), (1,)), ((), ())),
        preferred_element_type=jnp.float32)              # (1, TE)
    out_ref[...] = (z3 + b3_ref[...]).astype(out_ref.dtype)


def mlp_predictor_score(h_src, h_dst, params, *, tile_e=1024):
    """Scores edges given source/destination node embeddings.

    h_src, h_dst : [E, h_feats] float32
    params       : dict with w1 (2H,H), b1 (1,H), w2 (H,H//2), b2 (1,H//2),
                   w3 (H//2,1), b3 (1,1)   (weights stored [in, out])
    tile_e       : edge-tile size (multiple of 128; 1024-4096 recommended for
                   large E). E is padded internally; padded scores are dropped.
    returns      : [E] float32 edge scores
    """
    E, H = h_src.shape
    assert h_dst.shape == (E, H)
    assert tile_e % 128 == 0, "tile_e must be a multiple of 128 (lane-dense output)"

    # Pad the edge dimension to a multiple of tile_e (padded rows are dropped).
    E_pad = ((E + tile_e - 1) // tile_e) * tile_e
    if E_pad != E:
        pad = E_pad - E
        h_src = jnp.pad(h_src, ((0, pad), (0, 0)))
        h_dst = jnp.pad(h_dst, ((0, pad), (0, 0)))

    w1, b1 = params["w1"], params["b1"]
    w2, b2 = params["w2"], params["b2"]
    w3, b3 = params["w3"], params["b3"]

    # Split W1 once in the wrapper so we never materialize the [E, 2H] concat.
    w1a, w1b = w1[:H], w1[H:]          # (H, H) each
    w3_row = w3.T                      # (1, H//2)

    num_tiles = E_pad // tile_e
    # Full-array blocks with a constant index map -> weights stay resident in
    # VMEM for the whole grid.
    full = lambda a: pl.BlockSpec(a.shape, lambda i: (0,) * a.ndim)

    out = pl.pallas_call(
        _mlp_predictor_kernel,
        out_shape=jax.ShapeDtypeStruct((1, E_pad), jnp.float32),
        grid_spec=pltpu.PrefetchScalarGridSpec(
            num_scalar_prefetch=0,
            grid=(num_tiles,),
            in_specs=[
                pl.BlockSpec((tile_e, H), lambda i: (i, 0)),   # h_src tile
                pl.BlockSpec((tile_e, H), lambda i: (i, 0)),   # h_dst tile
                full(w1a), full(w1b), full(b1),
                full(w2), full(b2),
                full(w3_row), full(b3),
            ],
            out_specs=pl.BlockSpec((1, tile_e), lambda i: (0, i)),
        ),
        compiler_params=pltpu.CompilerParams(
            dimension_semantics=("parallel",)),
    )(h_src, h_dst, w1a, w1b, b1, w2, b2, w3_row, b3)

    return out.reshape(-1)[:E]  # squeeze(1) + drop padded edges


def mlp_predictor_score_user(user_embedding, item_embeddings, params, *, tile_e=1024):
    """Equivalent of MLPPredictor.score_user: broadcast one user against all items."""
    n_items = item_embeddings.shape[0]
    user_matrix = jnp.broadcast_to(user_embedding.reshape(1, -1),
                                   (n_items, item_embeddings.shape[1]))
    return mlp_predictor_score(user_matrix, item_embeddings, params, tile_e=tile_e)


def init_params(key, h_feats):
    """Deterministic init mimicking nn.Linear's uniform(-1/sqrt(fan_in), ...)."""
    def linear(key, fan_in, fan_out):
        kw, kb = jax.random.split(key)
        bound = 1.0 / jnp.sqrt(fan_in)
        # stored transposed: [in, out] so the kernel computes x @ W
        w = jax.random.uniform(kw, (fan_in, fan_out), jnp.float32, -bound, bound)
        b = jax.random.uniform(kb, (1, fan_out), jnp.float32, -bound, bound)
        return w, b

    k1, k2, k3 = jax.random.split(key, 3)
    w1, b1 = linear(k1, 2 * h_feats, h_feats)
    w2, b2 = linear(k2, h_feats, h_feats // 2)
    w3, b3 = linear(k3, h_feats // 2, 1)
    return dict(w1=w1, b1=b1, w2=w2, b2=b2, w3=w3, b3=b3)


def _reference(h_src, h_dst, p):
    h = jnp.concatenate([h_src, h_dst], axis=1)
    z1 = jax.nn.relu(h @ p["w1"] + p["b1"])
    z2 = jax.nn.relu(z1 @ p["w2"] + p["b2"])
    return (z2 @ p["w3"] + p["b3"])[:, 0]


if __name__ == "__main__":
    h_feats = 32       # H (W1: 64->32, W2: 32->16, W3: 16->1)
    num_edges = 300    # deliberately not a multiple of tile_e -> exercises padding

    key = jax.random.PRNGKey(0)
    kp, ks, kd = jax.random.split(key, 3)

    params = init_params(kp, h_feats)
    h_src = jax.random.normal(ks, (num_edges, h_feats), jnp.float32)
    h_dst = jax.random.normal(kd, (num_edges, h_feats), jnp.float32)

    # Small tile for the demo; use tile_e=1024..4096 for large edge counts.
    score = mlp_predictor_score(h_src, h_dst, params, tile_e=128)
    score = jax.block_until_ready(score)

    ref = _reference(h_src, h_dst, params)
    assert score.shape == (num_edges,)
    assert jnp.allclose(score, ref, atol=1e-5, rtol=1e-5)

    # score_user path (broadcast one user embedding against all items).
    user = h_src[0]
    s_user = jax.block_until_ready(
        mlp_predictor_score_user(user, h_dst, params, tile_e=128))
    ref_user = _reference(jnp.broadcast_to(user[None, :], h_dst.shape), h_dst, params)
    assert jnp.allclose(s_user, ref_user, atol=1e-5, rtol=1e-5)

    print("KERNEL_OK")
</pallas_src>

<mosaic_0001>
module attributes {stable_mosaic.version = 11 : i64} {
  func.func @_mlp_predictor_kernel(%arg0: i32, %arg1: memref<128x32xf32, #tpu.memory_space<vmem>>, %arg2: memref<128x32xf32, #tpu.memory_space<vmem>>, %arg3: memref<32x32xf32, #tpu.memory_space<vmem>>, %arg4: memref<32x32xf32, #tpu.memory_space<vmem>>, %arg5: memref<1x32xf32, #tpu.memory_space<vmem>>, %arg6: memref<32x16xf32, #tpu.memory_space<vmem>>, %arg7: memref<1x16xf32, #tpu.memory_space<vmem>>, %arg8: memref<1x16xf32, #tpu.memory_space<vmem>>, %arg9: memref<1x1xf32, #tpu.memory_space<vmem>>, %arg10: memref<1x128xf32, #tpu.memory_space<vmem>>) attributes {dimension_semantics = [#tpu.dimension_semantics<parallel>], iteration_bounds = array<i64: 3>, scalar_prefetch = 0 : i64, scratch_operands = 0 : i64, tpu.core_type = #tpu.core_type<tc>, window_params = [{transform_indices = @transform_0, window_bounds = array<i64: 128, 32>}, {transform_indices = @transform_1, window_bounds = array<i64: 128, 32>}, {pipeline_mode = #tpu.pipeline_mode<synchronous>, transform_indices = @transform_2, window_bounds = array<i64: 32, 32>}, {pipeline_mode = #tpu.pipeline_mode<synchronous>, transform_indices = @transform_3, window_bounds = array<i64: 32, 32>}, {pipeline_mode = #tpu.pipeline_mode<synchronous>, transform_indices = @transform_4, window_bounds = array<i64: 1, 32>}, {pipeline_mode = #tpu.pipeline_mode<synchronous>, transform_indices = @transform_5, window_bounds = array<i64: 32, 16>}, {pipeline_mode = #tpu.pipeline_mode<synchronous>, transform_indices = @transform_6, window_bounds = array<i64: 1, 16>}, {pipeline_mode = #tpu.pipeline_mode<synchronous>, transform_indices = @transform_7, window_bounds = array<i64: 1, 16>}, {pipeline_mode = #tpu.pipeline_mode<synchronous>, transform_indices = @transform_8, window_bounds = array<i64: 1, 1>}, {transform_indices = @transform_9, window_bounds = array<i64: 1, 128>}]} {
    %c0 = arith.constant 0 : index
    %c0_0 = arith.constant 0 : index
    %0 = vector.load %arg1[%c0, %c0_0] : memref<128x32xf32, #tpu.memory_space<vmem>>, vector<128x32xf32>
    %c0_1 = arith.constant 0 : index
    %c0_2 = arith.constant 0 : index
    %1 = vector.load %arg3[%c0_1, %c0_2] : memref<32x32xf32, #tpu.memory_space<vmem>>, vector<32x32xf32>
    %cst = arith.constant dense<0.000000e+00> : vector<128x32xf32>
    %2 = tpu.matmul %0, %1, %cst {dimension_numbers = #tpu.dot_dimension_numbers<[1], [0], [0], [1], [0, 0, 1, 1], [], []>} : vector<128x32xf32>, vector<32x32xf32>, vector<128x32xf32> -> vector<128x32xf32>
    %c0_3 = arith.constant 0 : index
    %c0_4 = arith.constant 0 : index
    %3 = vector.load %arg2[%c0_3, %c0_4] : memref<128x32xf32, #tpu.memory_space<vmem>>, vector<128x32xf32>
    %c0_5 = arith.constant 0 : index
    %c0_6 = arith.constant 0 : index
    %4 = vector.load %arg4[%c0_5, %c0_6] : memref<32x32xf32, #tpu.memory_space<vmem>>, vector<32x32xf32>
    %cst_7 = arith.constant dense<0.000000e+00> : vector<128x32xf32>
    %5 = tpu.matmul %3, %4, %cst_7 {dimension_numbers = #tpu.dot_dimension_numbers<[1], [0], [0], [1], [0, 0, 1, 1], [], []>} : vector<128x32xf32>, vector<32x32xf32>, vector<128x32xf32> -> vector<128x32xf32>
    %6 = arith.addf %2, %5 : vector<128x32xf32>
    %c0_8 = arith.constant 0 : index
    %c0_9 = arith.constant 0 : index
    %7 = vector.load %arg5[%c0_8, %c0_9] : memref<1x32xf32, #tpu.memory_space<vmem>>, vector<1x32xf32>
    %8 = vector.broadcast %7 : vector<1x32xf32> to vector<128x32xf32>
    %9 = arith.addf %6, %8 : vector<128x32xf32>
    %cst_10 = arith.constant 0.000000e+00 : f32
    %10 = vector.broadcast %cst_10 : f32 to vector<128x32xf32>
    %11 = arith.maximumf %9, %10 : vector<128x32xf32>
    %c0_11 = arith.constant 0 : index
    %c0_12 = arith.constant 0 : index
    %12 = vector.load %arg6[%c0_11, %c0_12] : memref<32x16xf32, #tpu.memory_space<vmem>>, vector<32x16xf32>
    %cst_13 = arith.constant dense<0.000000e+00> : vector<128x16xf32>
    %13 = tpu.matmul %11, %12, %cst_13 {dimension_numbers = #tpu.dot_dimension_numbers<[1], [0], [0], [1], [0, 0, 1, 1], [], []>} : vector<128x32xf32>, vector<32x16xf32>, vector<128x16xf32> -> vector<128x16xf32>
    %c0_14 = arith.constant 0 : index
    %c0_15 = arith.constant 0 : index
    %14 = vector.load %arg7[%c0_14, %c0_15] : memref<1x16xf32, #tpu.memory_space<vmem>>, vector<1x16xf32>
    %15 = vector.broadcast %14 : vector<1x16xf32> to vector<128x16xf32>
    %16 = arith.addf %13, %15 : vector<128x16xf32>
    %cst_16 = arith.constant 0.000000e+00 : f32
    %17 = vector.broadcast %cst_16 : f32 to vector<128x16xf32>
    %18 = arith.maximumf %16, %17 : vector<128x16xf32>
    %c0_17 = arith.constant 0 : index
    %c0_18 = arith.constant 0 : index
    %19 = vector.load %arg8[%c0_17, %c0_18] : memref<1x16xf32, #tpu.memory_space<vmem>>, vector<1x16xf32>
    %cst_19 = arith.constant dense<0.000000e+00> : vector<1x128xf32>
    %20 = tpu.matmul %19, %18, %cst_19 {dimension_numbers = #tpu.dot_dimension_numbers<[1], [1], [0], [0], [0, 0, 1, 0], [], []>} : vector<1x16xf32>, vector<128x16xf32>, vector<1x128xf32> -> vector<1x128xf32>
    %c0_20 = arith.constant 0 : index
    %c0_21 = arith.constant 0 : index
    %21 = vector.load %arg9[%c0_20, %c0_21] : memref<1x1xf32, #tpu.memory_space<vmem>>, vector<1x1xf32>
    %22 = vector.broadcast %21 : vector<1x1xf32> to vector<1x128xf32>
    %23 = arith.addf %20, %22 : vector<1x128xf32>
    %c0_22 = arith.constant 0 : index
    %c0_23 = arith.constant 0 : index
    %24 = vector.load %arg10[%c0_22, %c0_23] : memref<1x128xf32, #tpu.memory_space<vmem>>, vector<1x128xf32>
    tpu.vector_store %arg10[%c0_22, %c0_23], %23 {strides = array<i32>} : memref<1x128xf32, #tpu.memory_space<vmem>>, vector<1x128xf32>,
    return
  }
  func.func @transform_0(%arg0: i32) -> (i32, i32) {
    %c0_i32 = arith.constant 0 : i32
    %c0_i32_0 = arith.constant 0 : i32
    return %arg0, %c0_i32 : i32, i32
  }
  func.func @transform_1(%arg0: i32) -> (i32, i32) {
    %c0_i32 = arith.constant 0 : i32
    %c0_i32_0 = arith.constant 0 : i32
    return %arg0, %c0_i32 : i32, i32
  }
  func.func @transform_2(%arg0: i32) -> (i32, i32) {
    %c0_i32 = arith.constant 0 : i32
    %c0_i32_0 = arith.constant 0 : i32
    %c0_i32_1 = arith.constant 0 : i32
    return %c0_i32, %c0_i32_0 : i32, i32
  }
  func.func @transform_3(%arg0: i32) -> (i32, i32) {
    %c0_i32 = arith.constant 0 : i32
    %c0_i32_0 = arith.constant 0 : i32
    %c0_i32_1 = arith.constant 0 : i32
    return %c0_i32, %c0_i32_0 : i32, i32
  }
  func.func @transform_4(%arg0: i32) -> (i32, i32) {
    %c0_i32 = arith.constant 0 : i32
    %c0_i32_0 = arith.constant 0 : i32
    %c0_i32_1 = arith.constant 0 : i32
    return %c0_i32, %c0_i32_0 : i32, i32
  }
  func.func @transform_5(%arg0: i32) -> (i32, i32) {
    %c0_i32 = arith.constant 0 : i32
    %c0_i32_0 = arith.constant 0 : i32
    %c0_i32_1 = arith.constant 0 : i32
    return %c0_i32, %c0_i32_0 : i32, i32
  }
  func.func @transform_6(%arg0: i32) -> (i32, i32) {
    %c0_i32 = arith.constant 0 : i32
    %c0_i32_0 = arith.constant 0 : i32
    %c0_i32_1 = arith.constant 0 : i32
    return %c0_i32, %c0_i32_0 : i32, i32
  }
  func.func @transform_7(%arg0: i32) -> (i32, i32) {
    %c0_i32 = arith.constant 0 : i32
    %c0_i32_0 = arith.constant 0 : i32
    %c0_i32_1 = arith.constant 0 : i32
    return %c0_i32, %c0_i32_0 : i32, i32
  }
  func.func @transform_8(%arg0: i32) -> (i32, i32) {
    %c0_i32 = arith.constant 0 : i32
    %c0_i32_0 = arith.constant 0 : i32
    %c0_i32_1 = arith.constant 0 : i32
    return %c0_i32, %c0_i32_0 : i32, i32
  }
  func.func @transform_9(%arg0: i32) -> (i32, i32) {
    %c0_i32 = arith.constant 0 : i32
    %c0_i32_0 = arith.constant 0 : i32
    return %c0_i32, %arg0 : i32, i32
  }
}

</mosaic_0001>

<llo_original>
// kernel: tpu_custom_call.1
$region0: #{tpu_custom_call.1}
  #allocation0 [shape = 'u32[]', space=smem, size = 0x4, offset = 0x4, fixed_abs, tag = 'smem constant byte address 0x4 - core index']
  #allocation1 [shape = 'u32[144,128]{1,0:T(1,128)}', space=vmem, size = 0x12000, scoped, tag = 'internal scratch']
  #allocation2 [shape = 'f32[1,1]{1,0:T(1,128)S(1)}', space=vmem, size = 0x200, scoped, tag = 'scoped memory for tpu_custom_call.1']
  %s0 = inlined_call_operand.vmem [shape: f32[384,32], index: 0, kind: input, shape index: {}]
  %s1 = inlined_call_operand.vmem [shape: f32[384,32], index: 1, kind: input, shape index: {}]
  %s2 = inlined_call_operand.vmem [shape: f32[32,32], index: 2, kind: input, shape index: {}]
  %s3 = inlined_call_operand.vmem [shape: f32[32,32], index: 3, kind: input, shape index: {}]
  %s4 = inlined_call_operand.vmem [shape: f32[1,32], index: 4, kind: input, shape index: {}]
  %s5 = inlined_call_operand.vmem [shape: f32[32,16], index: 5, kind: input, shape index: {}]
  %s6 = inlined_call_operand.vmem [shape: f32[1,16], index: 6, kind: input, shape index: {}]
  %s7 = inlined_call_operand.vmem [shape: f32[1,16], index: 7, kind: input, shape index: {}]
  %s8 = inlined_call_operand.<no memory space> [shape: f32[1,1], index: 8, kind: input, shape index: {}]
  %s9 = inlined_call_operand.hbm [shape: f32[1,384], index: 9, kind: output, shape index: {}]
  %s10 = sld [smem:[#allocation0]]
  $region69: #{tpu_custom_call.1} parent=0
    _
  %s12 = ssub.s32 1, %s10
  %s13 = scalar_select 0, %s12, %s10
  %v14 = vstv %s8
  %15 = vst [vmem:[#allocation2] sm:$0x1] %v14
  $region1: #{tpu_custom_call.1} parent=0
    #allocation3 [shape = 'u8[1024]{0}', space=vmem, size = 0x400, scoped, tag = 'output window, operand 0']
    #allocation4 [shape = 's32[2]{0}', space=sflag, size = 0x8, scoped, tag = 'scoped memory for tpu_custom_call.1']
    %16 = vsyncpa [#allocation4], 0
    %s17 = scalar_lea.sflag [#allocation4], 1
    %18 = vsyncpa %s17, 0
    loop: start=0, step=1, limit=5
    $region2: #{tpu_custom_call.1} parent=1 // loop_pre_header
      _
    $region3: #{tpu_custom_call.1} parent=1 // loop_header
      %s20 = sphi 0, %s24
      %p21 = scmp.ge.s32.totalorder %s20, 5
      %s30 = sphi 0, %s32
      %s33 = sphi 0, %s30
      %s34 = sphi 0, %s33
      %s50 = sphi 0, %s34
      %s56 = sphi 0, %s58
      %s59 = sphi 0, %s56
      %s60 = sphi 0, %s59
      %s76 = sphi 0, %s60
      %s80 = sphi 0, %s80
      %s82 = sphi 0, %s80
      %s83 = sphi 0, %s82
      %s97 = sphi 0, %s83
      %s101 = sphi 0, %s101
      %s103 = sphi 0, %s101
      %s104 = sphi 0, %s103
      %s118 = sphi 0, %s104
      %s122 = sphi 0, %s122
      %s124 = sphi 0, %s122
      %s125 = sphi 0, %s124
      %s139 = sphi 0, %s125
      %s143 = sphi 0, %s143
      %s145 = sphi 0, %s143
      %s146 = sphi 0, %s145
      %s160 = sphi 0, %s146
      %s164 = sphi 0, %s164
      %s166 = sphi 0, %s164
      %s167 = sphi 0, %s166
      %s181 = sphi 0, %s167
      %s185 = sphi 0, %s185
      %s187 = sphi 0, %s185
      %s188 = sphi 0, %s187
      %s202 = sphi 0, %s188
      %s206 = sphi 0, %s206
      %s208 = sphi 0, %s206
      %s209 = sphi 0, %s208
      %s223 = sphi 0, %s209
      %s229 = sphi 0, %s231
      %s232 = sphi 0, %s229
      %s233 = sphi 0, %s232
      %s249 = sphi 0, %s233
    $region4: #{tpu_custom_call.1} parent=1 // loop_header_branch
      %23 = sbr.rel (%p21) target = $region8
    $region5: #{tpu_custom_call.1} parent=1 // loop_body
      %s25 = ssub.s32 %s20, 1
      %s26 = ssub.s32 %s20, 2
      %s27 = sadd.s32 %s20, 1
      %s28 = ssub.s32 %s20, %s27
      %p29 = scmp.eq.s32.totalorder %s28, 0
      %s31 = sadd.s32 %s30, 1
      %s32 = scalar_select %p29, %s30, %s31
      %p35 = pneg %p29
      %p36 = scmp.eq.s32.totalorder %s20, 2
      %p37 = por %p35, %p36
      %p38 = scmp.ne.s32.totalorder %s30, %s33
      %p39 = scmp.eq.s32.totalorder %s20, 0
      %p40 = por %p38, %p39
      %p41 = scmp.ne.s32.totalorder %s30, %s33
      %p42 = scmp.eq.s32.totalorder %s25, 2
      %p43 = por %p41, %p42
      %p44 = scmp.ne.s32.totalorder %s33, %s34
      %p45 = scmp.eq.s32.totalorder %s25, 0
      %p46 = por %p44, %p45
      %p47 = scmp.ne.s32.totalorder %s33, %s34
      %p48 = scmp.eq.s32.totalorder %s26, 2
      %p49 = por %p47, %p48
      %p51 = scmp.ne.s32.totalorder %s34, %s50
      %p52 = scmp.eq.s32.totalorder %s26, 0
      %p53 = por %p51, %p52
      %s54 = ssub.s32 %s20, %s27
      %p55 = scmp.eq.s32.totalorder %s54, 0
      %s57 = sadd.s32 %s56, 1
      %s58 = scalar_select %p55, %s56, %s57
      %p61 = pneg %p55
      %p62 = scmp.eq.s32.totalorder %s20, 2
      %p63 = por %p61, %p62
      %p64 = scmp.ne.s32.totalorder %s56, %s59
      %p65 = scmp.eq.s32.totalorder %s20, 0
      %p66 = por %p64, %p65
      %p67 = scmp.ne.s32.totalorder %s56, %s59
      %p68 = scmp.eq.s32.totalorder %s25, 2
      %p69 = por %p67, %p68
      %p70 = scmp.ne.s32.totalorder %s59, %s60
      %p71 = scmp.eq.s32.totalorder %s25, 0
      %p72 = por %p70, %p71
      %p73 = scmp.ne.s32.totalorder %s59, %s60
      %p74 = scmp.eq.s32.totalorder %s26, 2
      %p75 = por %p73, %p74
      %p77 = scmp.ne.s32.totalorder %s60, %s76
      %p78 = scmp.eq.s32.totalorder %s26, 0
      %p79 = por %p77, %p78
      %s81 = sadd.s32 %s80, 1
      %p84 = scmp.eq.s32.totalorder %s20, 2
      %p85 = scmp.ne.s32.totalorder %s80, %s82
      %p86 = scmp.eq.s32.totalorder %s20, 0
      %p87 = por %p85, %p86
      %p88 = scmp.ne.s32.totalorder %s80, %s82
      %p89 = scmp.eq.s32.totalorder %s25, 2
      %p90 = por %p88, %p89
      %p91 = scmp.ne.s32.totalorder %s82, %s83
      %p92 = scmp.eq.s32.totalorder %s25, 0
      %p93 = por %p91, %p92
      %p94 = scmp.ne.s32.totalorder %s82, %s83
      %p95 = scmp.eq.s32.totalorder %s26, 2
      %p96 = por %p94, %p95
      %p98 = scmp.ne.s32.totalorder %s83, %s97
      %p99 = scmp.eq.s32.totalorder %s26, 0
      %p100 = por %p98, %p99
      %s102 = sadd.s32 %s101, 1
      %p105 = scmp.eq.s32.totalorder %s20, 2
      %p106 = scmp.ne.s32.totalorder %s101, %s103
      %p107 = scmp.eq.s32.totalorder %s20, 0
      %p108 = por %p106, %p107
      %p109 = scmp.ne.s32.totalorder %s101, %s103
      %p110 = scmp.eq.s32.totalorder %s25, 2
      %p111 = por %p109, %p110
      %p112 = scmp.ne.s32.totalorder %s103, %s104
      %p113 = scmp.eq.s32.totalorder %s25, 0
      %p114 = por %p112, %p113
      %p115 = scmp.ne.s32.totalorder %s103, %s104
      %p116 = scmp.eq.s32.totalorder %s26, 2
      %p117 = por %p115, %p116
      %p119 = scmp.ne.s32.totalorder %s104, %s118
      %p120 = scmp.eq.s32.totalorder %s26, 0
      %p121 = por %p119, %p120
      %s123 = sadd.s32 %s122, 1
      %p126 = scmp.eq.s32.totalorder %s20, 2
      %p127 = scmp.ne.s32.totalorder %s122, %s124
      %p128 = scmp.eq.s32.totalorder %s20, 0
      %p129 = por %p127, %p128
      %p130 = scmp.ne.s32.totalorder %s122, %s124
      %p131 = scmp.eq.s32.totalorder %s25, 2
      %p132 = por %p130, %p131
      %p133 = scmp.ne.s32.totalorder %s124, %s125
      %p134 = scmp.eq.s32.totalorder %s25, 0
      %p135 = por %p133, %p134
      %p136 = scmp.ne.s32.totalorder %s124, %s125
      %p137 = scmp.eq.s32.totalorder %s26, 2
      %p138 = por %p136, %p137
      %p140 = scmp.ne.s32.totalorder %s125, %s139
      %p141 = scmp.eq.s32.totalorder %s26, 0
      %p142 = por %p140, %p141
      %s144 = sadd.s32 %s143, 1
      %p147 = scmp.eq.s32.totalorder %s20, 2
      %p148 = scmp.ne.s32.totalorder %s143, %s145
      %p149 = scmp.eq.s32.totalorder %s20, 0
      %p150 = por %p148, %p149
      %p151 = scmp.ne.s32.totalorder %s143, %s145
      %p152 = scmp.eq.s32.totalorder %s25, 2
      %p153 = por %p151, %p152
      %p154 = scmp.ne.s32.totalorder %s145, %s146
      %p155 = scmp.eq.s32.totalorder %s25, 0
      %p156 = por %p154, %p155
      %p157 = scmp.ne.s32.totalorder %s145, %s146
      %p158 = scmp.eq.s32.totalorder %s26, 2
      %p159 = por %p157, %p158
      %p161 = scmp.ne.s32.totalorder %s146, %s160
      %p162 = scmp.eq.s32.totalorder %s26, 0
      %p163 = por %p161, %p162
      %s165 = sadd.s32 %s164, 1
      %p168 = scmp.eq.s32.totalorder %s20, 2
      %p169 = scmp.ne.s32.totalorder %s164, %s166
      %p170 = scmp.eq.s32.totalorder %s20, 0
      %p171 = por %p169, %p170
      %p172 = scmp.ne.s32.totalorder %s164, %s166
      %p173 = scmp.eq.s32.totalorder %s25, 2
      %p174 = por %p172, %p173
      %p175 = scmp.ne.s32.totalorder %s166, %s167
      %p176 = scmp.eq.s32.totalorder %s25, 0
      %p177 = por %p175, %p176
      %p178 = scmp.ne.s32.totalorder %s166, %s167
      %p179 = scmp.eq.s32.totalorder %s26, 2
      %p180 = por %p178, %p179
      %p182 = scmp.ne.s32.totalorder %s167, %s181
      %p183 = scmp.eq.s32.totalorder %s26, 0
      %p184 = por %p182, %p183
      %s186 = sadd.s32 %s185, 1
      %p189 = scmp.eq.s32.totalorder %s20, 2
      %p190 = scmp.ne.s32.totalorder %s185, %s187
      %p191 = scmp.eq.s32.totalorder %s20, 0
      %p192 = por %p190, %p191
      %p193 = scmp.ne.s32.totalorder %s185, %s187
      %p194 = scmp.eq.s32.totalorder %s25, 2
      %p195 = por %p193, %p194
      %p196 = scmp.ne.s32.totalorder %s187, %s188
      %p197 = scmp.eq.s32.totalorder %s25, 0
      %p198 = por %p196, %p197
      %p199 = scmp.ne.s32.totalorder %s187, %s188
      %p200 = scmp.eq.s32.totalorder %s26, 2
      %p201 = por %p199, %p200
      %p203 = scmp.ne.s32.totalorder %s188, %s202
      %p204 = scmp.eq.s32.totalorder %s26, 0
      %p205 = por %p203, %p204
      %s207 = sadd.s32 %s206, 1
      %p210 = scmp.eq.s32.totalorder %s20, 2
      %p211 = scmp.ne.s32.totalorder %s206, %s208
      %p212 = scmp.eq.s32.totalorder %s20, 0
      %p213 = por %p211, %p212
      %p214 = scmp.ne.s32.totalorder %s206, %s208
      %p215 = scmp.eq.s32.totalorder %s25, 2
      %p216 = por %p214, %p215
      %p217 = scmp.ne.s32.totalorder %s208, %s209
      %p218 = scmp.eq.s32.totalorder %s25, 0
      %p219 = por %p217, %p218
      %p220 = scmp.ne.s32.totalorder %s208, %s209
      %p221 = scmp.eq.s32.totalorder %s26, 2
      %p222 = por %p220, %p221
      %p224 = scmp.ne.s32.totalorder %s209, %s223
      %p225 = scmp.eq.s32.totalorder %s26, 0
      %p226 = por %p224, %p225
      %s227 = ssub.s32 %s20, %s27
      %p228 = scmp.eq.s32.totalorder %s227, 0
      %s230 = sadd.s32 %s229, 1
      %s231 = scalar_select %p228, %s229, %s230
      %p234 = pneg %p228
      %p235 = scmp.eq.s32.totalorder %s20, 2
      %p236 = por %p234, %p235
      %p237 = scmp.ne.s32.totalorder %s229, %s232
      %p238 = scmp.eq.s32.totalorder %s20, 0
      %p239 = por %p237, %p238
      %p240 = scmp.ne.s32.totalorder %s229, %s232
      %p241 = scmp.eq.s32.totalorder %s25, 2
      %p242 = por %p240, %p241
      %p243 = scmp.ne.s32.totalorder %s232, %s233
      %p244 = scmp.eq.s32.totalorder %s25, 0
      %p245 = por %p243, %p244
      %p246 = scmp.ne.s32.totalorder %s232, %s233
      %p247 = scmp.eq.s32.totalorder %s26, 2
      %p248 = por %p246, %p247
      %p250 = scmp.ne.s32.totalorder %s233, %s249
      %p251 = scmp.eq.s32.totalorder %s26, 0
      %p252 = por %p250, %p251
      %p253 = scmp.le.s32.totalorder 1, %s20
      %p254 = scmp.lt.s32.totalorder %s20, 4
      %p255 = pnand %p253, %p254
      %p256 = pneg %p255
      // Predicated region
      $region9: #{tpu_custom_call.1} parent=5 // pred_check
        _
      $region10: #{tpu_custom_call.1} parent=5 // pred_check_branch
        %258 = sbr.rel (%p255) target = $region12
      $region11: #{tpu_custom_call.1} parent=5 // pred_region
        %s259 = ssub.s32 %s20, 1
        // Predicated region
        $region13: #{tpu_custom_call.1} parent=11 // pred_check
          %p260 = pneg %p93
        $region14: #{tpu_custom_call.1} parent=11 // pred_check_branch
          %262 = sbr.rel (%p260) target = $region16
        $region15: #{tpu_custom_call.1} parent=11 // pred_region
          _
        $region16: #{tpu_custom_call.1} parent=11 // pred_fallthru
          _
        // Predicated region
        $region17: #{tpu_custom_call.1} parent=11 // pred_check
          %p263 = pneg %p114
        $region18: #{tpu_custom_call.1} parent=11 // pred_check_branch
          %265 = sbr.rel (%p263) target = $region20
        $region19: #{tpu_custom_call.1} parent=11 // pred_region
          _
        $region20: #{tpu_custom_call.1} parent=11 // pred_fallthru
          _
        // Predicated region
        $region21: #{tpu_custom_call.1} parent=11 // pred_check
          %p266 = pneg %p135
        $region22: #{tpu_custom_call.1} parent=11 // pred_check_branch
          %268 = sbr.rel (%p266) target = $region24
        $region23: #{tpu_custom_call.1} parent=11 // pred_region
          _
        $region24: #{tpu_custom_call.1} parent=11 // pred_fallthru
          _
        // Predicated region
        $region25: #{tpu_custom_call.1} parent=11 // pred_check
          %p269 = pneg %p156
        $region26: #{tpu_custom_call.1} parent=11 // pred_check_branch
          %271 = sbr.rel (%p269) target = $region28
        $region27: #{tpu_custom_call.1} parent=11 // pred_region
          _
        $region28: #{tpu_custom_call.1} parent=11 // pred_fallthru
          _
        // Predicated region
        $region29: #{tpu_custom_call.1} parent=11 // pred_check
          %p272 = pneg %p177
        $region30: #{tpu_custom_call.1} parent=11 // pred_check_branch
          %274 = sbr.rel (%p272) target = $region32
        $region31: #{tpu_custom_call.1} parent=11 // pred_region
          _
        $region32: #{tpu_custom_call.1} parent=11 // pred_fallthru
          _
        // Predicated region
        $region33: #{tpu_custom_call.1} parent=11 // pred_check
          %p275 = pneg %p198
        $region34: #{tpu_custom_call.1} parent=11 // pred_check_branch
          %277 = sbr.rel (%p275) target = $region36
        $region35: #{tpu_custom_call.1} parent=11 // pred_region
          _
        $region36: #{tpu_custom_call.1} parent=11 // pred_fallthru
          _
        // Predicated region
        $region37: #{tpu_custom_call.1} parent=11 // pred_check
          %p278 = pneg %p219
        $region38: #{tpu_custom_call.1} parent=11 // pred_check_branch
          %280 = sbr.rel (%p278) target = $region40
        $region39: #{tpu_custom_call.1} parent=11 // pred_region
          _
        $region40: #{tpu_custom_call.1} parent=11 // pred_fallthru
          _
      $region12: #{tpu_custom_call.1} parent=5 // pred_fallthru
        _
      %p281 = scmp.lt.s32.totalorder %s20, 3
      // Predicated region
      $region41: #{tpu_custom_call.1} parent=5 // pred_check
        %p282 = pneg %p281
      $region42: #{tpu_custom_call.1} parent=5 // pred_check_branch
        %284 = sbr.rel (%p282) target = $region44
      $region43: #{tpu_custom_call.1} parent=5 // pred_region
        // Predicated region
        $region45: #{tpu_custom_call.1} parent=43 // pred_check
          %p285 = pneg %p40
        $region46: #{tpu_custom_call.1} parent=43 // pred_check_branch
          %287 = sbr.rel (%p285) target = $region48
        $region47: #{tpu_custom_call.1} parent=43 // pred_region
          %s288 = smul.u32 16, %s20
          %p289 = scmp.lt.s32.totalorder %s288, 47
          %s290 = scalar_select %p289, %s288, 47
          %s291 = smul.addr %s290, 8
          %s292 = scalar_lea.vmem %s0, %s291
          %s293 = smul.u32 16, %s20
        $region48: #{tpu_custom_call.1} parent=43 // pred_fallthru
          _
        // Predicated region
        $region49: #{tpu_custom_call.1} parent=43 // pred_check
          %p294 = pneg %p66
        $region50: #{tpu_custom_call.1} parent=43 // pred_check_branch
          %296 = sbr.rel (%p294) target = $region52
        $region51: #{tpu_custom_call.1} parent=43 // pred_region
          %s297 = smul.u32 16, %s20
          %p298 = scmp.lt.s32.totalorder %s297, 47
          %s299 = scalar_select %p298, %s297, 47
          %s300 = smul.addr %s299, 8
          %s301 = scalar_lea.vmem %s1, %s300
          %s302 = smul.u32 16, %s20
        $region52: #{tpu_custom_call.1} parent=43 // pred_fallthru
          _
      $region44: #{tpu_custom_call.1} parent=5 // pred_fallthru
        _
      %p303 = scmp.le.s32.totalorder 1, %s20
      %p304 = scmp.lt.s32.totalorder %s20, 4
      %p305 = pnand %p303, %p304
      %p306 = pneg %p305
      // Predicated region
      $region53: #{tpu_custom_call.1} parent=5 // pred_check
        _
      $region54: #{tpu_custom_call.1} parent=5 // pred_check_branch
        %308 = sbr.rel (%p305) target = $region56
      $region55: #{tpu_custom_call.1} parent=5 // pred_region
        %s309 = ssub.s32 %s20, 1
        %s310 = smul.u32 16, %s25
        %p311 = scmp.lt.s32.totalorder %s310, 47
        %s312 = scalar_select %p311, %s310, 47
        %s313 = smul.addr %s312, 8
        %s314 = scalar_lea.vmem %s0, %s313
        %p315 = pneg %p46
        %p316 = pneg %p43
        %s317 = smul.u32 16, %s25
        %p318 = scmp.lt.s32.totalorder %s317, 47
        %s319 = scalar_select %p318, %s317, 47
        %s320 = smul.addr %s319, 8
        %s321 = scalar_lea.vmem %s1, %s320
        %p322 = pneg %p72
        %p323 = pneg %p69
        %p324 = pneg %p93
        %p325 = pneg %p90
        %p326 = pneg %p114
        %p327 = pneg %p111
        %p328 = pneg %p135
        %p329 = pneg %p132
        %p330 = pneg %p156
        %p331 = pneg %p153
        %p332 = pneg %p177
        %p333 = pneg %p174
        %p334 = pneg %p198
        %p335 = pneg %p195
        %p336 = pneg %p219
        %p337 = pneg %p216
        %p338 = pneg %p245
        %p339 = pneg %p242
        %s340 = sand.u32 %s232, 1
        %s341 = scalar_lea.sflag [#allocation4], %s340
        %s342 = sand.u32 %s232, 1
        %s343 = scalar_lea.vmem [#allocation3], %s342
        %s344 = smul.u32 16, %s25
        %p345 = scmp.lt.s32.totalorder %s344, 47
        %s346 = scalar_select %p345, %s344, 47
        %s347 = smul.addr %s346, 8
        %s348 = scalar_lea.vmem %s0, %s347
        %s349 = smul.u32 16, %s25
        %s350 = smul.u32 16, %s25
        %p351 = scmp.lt.s32.totalorder %s350, 47
        %s352 = scalar_select %p351, %s350, 47
        %s353 = smul.addr %s352, 8
        %s354 = scalar_lea.vmem %s1, %s353
        %s355 = smul.u32 16, %s25
        %v356 = vld [vmem:[%s348] sm:$0xff]
        %v357 = vld [vmem:[%s348 + $0x8] sm:$0xff]
        %v358 = vld [vmem:[%s348 + $0x10] sm:$0xff]
        %v359 = vld [vmem:[%s348 + $0x18] sm:$0xff]
        %v360 = vld [vmem:[%s348 + $0x20] sm:$0xff]
        %v361 = vld [vmem:[%s348 + $0x28] sm:$0xff]
        %v362 = vld [vmem:[%s348 + $0x30] sm:$0xff]
        %v363 = vld [vmem:[%s348 + $0x38] sm:$0xff]
        %v364 = vld [vmem:[%s348 + $0x40] sm:$0xff]
        %v365 = vld [vmem:[%s348 + $0x48] sm:$0xff]
        %v366 = vld [vmem:[%s348 + $0x50] sm:$0xff]
        %v367 = vld [vmem:[%s348 + $0x58] sm:$0xff]
        %v368 = vld [vmem:[%s348 + $0x60] sm:$0xff]
        %v369 = vld [vmem:[%s348 + $0x68] sm:$0xff]
        %v370 = vld [vmem:[%s348 + $0x70] sm:$0xff]
        %v371 = vld [vmem:[%s348 + $0x78] sm:$0xff]
        %v372 = vld [vmem:[%s2] sm:$0xff]
        %v373 = vld [vmem:[%s2 + $0x8] sm:$0xff]
        %v374 = vld [vmem:[%s2 + $0x10] sm:$0xff]
        %v375 = vld [vmem:[%s2 + $0x18] sm:$0xff]
        %v376 = vld [vmem:[%s354] sm:$0xff]
        %v377 = vld [vmem:[%s354 + $0x8] sm:$0xff]
        %v378 = vld [vmem:[%s354 + $0x10] sm:$0xff]
        %v379 = vld [vmem:[%s354 + $0x18] sm:$0xff]
        %v380 = vld [vmem:[%s354 + $0x20] sm:$0xff]
        %v381 = vld [vmem:[%s354 + $0x28] sm:$0xff]
        %v382 = vld [vmem:[%s354 + $0x30] sm:$0xff]
        %v383 = vld [vmem:[%s354 + $0x38] sm:$0xff]
        %v384 = vld [vmem:[%s354 + $0x40] sm:$0xff]
        %v385 = vld [vmem:[%s354 + $0x48] sm:$0xff]
        %v386 = vld [vmem:[%s354 + $0x50] sm:$0xff]
        %v387 = vld [vmem:[%s354 + $0x58] sm:$0xff]
        %v388 = vld [vmem:[%s354 + $0x60] sm:$0xff]
        %v389 = vld [vmem:[%s354 + $0x68] sm:$0xff]
        %v390 = vld [vmem:[%s354 + $0x70] sm:$0xff]
        %v391 = vld [vmem:[%s354 + $0x78] sm:$0xff]
        %v392 = vld [vmem:[%s3] sm:$0xff]
        %v393 = vld [vmem:[%s3 + $0x8] sm:$0xff]
        %v394 = vld [vmem:[%s3 + $0x10] sm:$0xff]
        %v395 = vld [vmem:[%s3 + $0x18] sm:$0xff]
        %vm396 = vcmask 261120
        %v398 = vsel %vm396, %v376, 0
        %v401 = vsel %vm396, %v377, 0
        %v404 = vsel %vm396, %v378, 0
        %v407 = vsel %vm396, %v379, 0
        %v410 = vsel %vm396, %v380, 0
        %v413 = vsel %vm396, %v381, 0
        %v416 = vsel %vm396, %v382, 0
        %v419 = vsel %vm396, %v383, 0
        %v422 = vsel %vm396, %v384, 0
        %v425 = vsel %vm396, %v385, 0
        %v428 = vsel %vm396, %v386, 0
        %v431 = vsel %vm396, %v387, 0
        %v434 = vsel %vm396, %v388, 0
        %v437 = vsel %vm396, %v389, 0
        %v440 = vsel %vm396, %v390, 0
        %v443 = vsel %vm396, %v391, 0
        %445 = vmatprep.subr.mxu0 0.0
        %446 = vmatpush1.msra.mxu0 %v392
        %447 = vmatprep.subr.mxu0 0.0
        %448 = vmatpush1.msra.mxu0 %v393
        %449 = vmatprep.subr.mxu0 0.0
        %450 = vmatpush1.msra.mxu0 %v394
        %451 = vmatprep.subr.mxu0 0.0
        %452 = vmatpush1.msra.mxu0 %v395
        %453 = vmatprep.subr.mxu0 0.0
        %454 = vmatpush1.msra.mxu0 0.0
        %455 = vmatprep.subr.mxu0 0.0
        %456 = vmatpush1.msra.mxu0 0.0
        %457 = vmatprep.subr.mxu0 0.0
        %458 = vmatpush1.msra.mxu0 0.0
        %459 = vmatprep.subr.mxu0 0.0
        %460 = vmatpush1.msra.mxu0 0.0
        %461 = vmatprep.subr.mxu0 0.0
        %462 = vmatpush1.msra.mxu0 0.0
        %463 = vmatprep.subr.mxu0 0.0
        %464 = vmatpush1.msra.mxu0 0.0
        %465 = vmatprep.subr.mxu0 0.0
        %466 = vmatpush1.msra.mxu0 0.0
        %467 = vmatprep.subr.mxu0 0.0
        %468 = vmatpush1.msra.mxu0 0.0
        %469 = vmatprep.subr.mxu0 0.0
        %470 = vmatpush1.msra.mxu0 0.0
        %471 = vmatprep.subr.mxu0 0.0
        %472 = vmatpush1.msra.mxu0 0.0
        %473 = vmatprep.subr.mxu0 0.0
        %474 = vmatpush1.msra.mxu0 0.0
        %475 = vmatprep.subr.mxu0 0.0
        %476 = vmatpush1.msra.mxu0 0.0
        %477 = vmatprep.subr.mxu0 0.0
        %478 = vmatpush1.msra.mxu0 0.0
        %479 = vmatprep.subr.mxu0 0.0
        %480 = vmatpush1.msra.mxu0 0.0
        %481 = vmatprep.subr.mxu0 0.0
        %482 = vmatpush1.msra.mxu0 0.0
        %483 = vmatprep.subr.mxu0 0.0
        %484 = vmatpush1.msra.mxu0 0.0
        %485 = vmatprep.subr.mxu0 0.0
        %486 = vmatpush1.msra.mxu0 0.0
        %487 = vmatprep.subr.mxu0 0.0
        %488 = vmatpush1.msra.mxu0 0.0
        %489 = vmatprep.subr.mxu0 0.0
        %490 = vmatpush1.msra.mxu0 0.0
        %491 = vmatprep.subr.mxu0 0.0
        %492 = vmatpush1.msra.mxu0 0.0
        %493 = vmatprep.subr.mxu0 0.0
        %494 = vmatpush1.msra.mxu0 0.0
        %495 = vmatprep.subr.mxu0 0.0
        %496 = vmatpush1.msra.mxu0 0.0
        %497 = vmatprep.subr.mxu0 0.0
        %498 = vmatpush1.msra.mxu0 0.0
        %499 = vmatprep.subr.mxu0 0.0
        %500 = vmatpush1.msra.mxu0 0.0
        %501 = vmatprep.subr.mxu0 0.0
        %502 = vmatpush1.msra.mxu0 0.0
        %503 = vmatprep.subr.mxu0 0.0
        %504 = vmatpush1.msra.mxu0 0.0
        %505 = vmatprep.subr.mxu0 0.0
        %506 = vmatpush1.msra.mxu0 0.0
        %507 = vmatprep.subr.mxu0 0.0
        %508 = vmatpush1.msra.mxu0 0.0
        %509 = vmatprep.mubr.f32.mxu0 0.0
        %510 = vmatmul.mubr.f32.gmra.mrb[0].mxu0 %v398
        %v511 = vpop.f32.mrb[0].mxu0
        %v512 = vadd.f32 0.0, %v511
        %v513 = vpop.f32.mrb[0].mxu0
        %514 = vmatprep.mubr.f32.mxu0 0.0
        %515 = vmatmul.mubr.f32.gmra.mrb[0].mxu0 %v401
        %v516 = vpop.f32.mrb[0].mxu0
        %v517 = vadd.f32 0.0, %v516
        %v518 = vpop.f32.mrb[0].mxu0
        %519 = vmatprep.mubr.f32.mxu0 0.0
        %520 = vmatmul.mubr.f32.gmra.mrb[0].mxu0 %v404
        %v521 = vpop.f32.mrb[0].mxu0
        %v522 = vadd.f32 0.0, %v521
        %v523 = vpop.f32.mrb[0].mxu0
        %524 = vmatprep.mubr.f32.mxu0 0.0
        %525 = vmatmul.mubr.f32.gmra.mrb[0].mxu0 %v407
        %v526 = vpop.f32.mrb[0].mxu0
        %v527 = vadd.f32 0.0, %v526
        %v528 = vpop.f32.mrb[0].mxu0
        %529 = vmatprep.mubr.f32.mxu0 0.0
        %530 = vmatmul.mubr.f32.gmra.mrb[0].mxu0 %v410
        %v531 = vpop.f32.mrb[0].mxu0
        %v532 = vadd.f32 0.0, %v531
        %v533 = vpop.f32.mrb[0].mxu0
        %534 = vmatprep.mubr.f32.mxu0 0.0
        %535 = vmatmul.mubr.f32.gmra.mrb[0].mxu0 %v413
        %v536 = vpop.f32.mrb[0].mxu0
        %v537 = vadd.f32 0.0, %v536
        %v538 = vpop.f32.mrb[0].mxu0
        %539 = vmatprep.mubr.f32.mxu0 0.0
        %540 = vmatmul.mubr.f32.gmra.mrb[0].mxu0 %v416
        %v541 = vpop.f32.mrb[0].mxu0
        %v542 = vadd.f32 0.0, %v541
        %v543 = vpop.f32.mrb[0].mxu0
        %544 = vmatprep.mubr.f32.mxu0 0.0
        %545 = vmatmul.mubr.f32.gmra.mrb[0].mxu0 %v419
        %v546 = vpop.f32.mrb[0].mxu0
        %v547 = vadd.f32 0.0, %v546
        %v548 = vpop.f32.mrb[0].mxu0
        %549 = vmatprep.mubr.f32.mxu0 0.0
        %550 = vmatmul.mubr.f32.gmra.mrb[0].mxu0 %v422
        %v551 = vpop.f32.mrb[0].mxu0
        %v552 = vadd.f32 0.0, %v551
        %v553 = vpop.f32.mrb[0].mxu0
        %554 = vmatprep.mubr.f32.mxu0 0.0
        %555 = vmatmul.mubr.f32.gmra.mrb[0].mxu0 %v425
        %v556 = vpop.f32.mrb[0].mxu0
        %v557 = vadd.f32 0.0, %v556
        %v558 = vpop.f32.mrb[0].mxu0
        %559 = vmatprep.mubr.f32.mxu0 0.0
        %560 = vmatmul.mubr.f32.gmra.mrb[0].mxu0 %v428
        %v561 = vpop.f32.mrb[0].mxu0
        %v562 = vadd.f32 0.0, %v561
        %v563 = vpop.f32.mrb[0].mxu0
        %564 = vmatprep.mubr.f32.mxu0 0.0
        %565 = vmatmul.mubr.f32.gmra.mrb[0].mxu0 %v431
        %v566 = vpop.f32.mrb[0].mxu0
        %v567 = vadd.f32 0.0, %v566
        %v568 = vpop.f32.mrb[0].mxu0
        %569 = vmatprep.mubr.f32.mxu0 0.0
        %570 = vmatmul.mubr.f32.gmra.mrb[0].mxu0 %v434
        %v571 = vpop.f32.mrb[0].mxu0
        %v572 = vadd.f32 0.0, %v571
        %v573 = vpop.f32.mrb[0].mxu0
        %574 = vmatprep.mubr.f32.mxu0 0.0
        %575 = vmatmul.mubr.f32.gmra.mrb[0].mxu0 %v437
        %v576 = vpop.f32.mrb[0].mxu0
        %v577 = vadd.f32 0.0, %v576
        %v578 = vpop.f32.mrb[0].mxu0
        %579 = vmatprep.mubr.f32.mxu0 0.0
        %580 = vmatmul.mubr.f32.gmra.mrb[0].mxu0 %v440
        %v581 = vpop.f32.mrb[0].mxu0
        %v582 = vadd.f32 0.0, %v581
        %v583 = vpop.f32.mrb[0].mxu0
        %584 = vmatprep.mubr.f32.mxu0 0.0
        %585 = vmatmul.mubr.f32.gmra.mrb[0].mxu0 %v443
        %v586 = vpop.f32.mrb[0].mxu0
        %v587 = vadd.f32 0.0, %v586
        %v588 = vpop.f32.mrb[0].mxu0
        %589 = vdwg.mxu0
        %v591 = vsel %vm396, %v356, 0
        %v594 = vsel %vm396, %v357, 0
        %v597 = vsel %vm396, %v358, 0
        %v600 = vsel %vm396, %v359, 0
        %v603 = vsel %vm396, %v360, 0
        %v606 = vsel %vm396, %v361, 0
        %v609 = vsel %vm396, %v362, 0
        %v612 = vsel %vm396, %v363, 0
        %v615 = vsel %vm396, %v364, 0
        %v618 = vsel %vm396, %v365, 0
        %v621 = vsel %vm396, %v366, 0
        %v624 = vsel %vm396, %v367, 0
        %v627 = vsel %vm396, %v368, 0
        %v630 = vsel %vm396, %v369, 0
        %v633 = vsel %vm396, %v370, 0
        %v636 = vsel %vm396, %v371, 0
        %638 = vmatprep.subr.mxu0 0.0
        %639 = vmatpush1.msra.mxu0 %v372
        %640 = vmatprep.subr.mxu0 0.0
        %641 = vmatpush1.msra.mxu0 %v373
        %642 = vmatprep.subr.mxu0 0.0
        %643 = vmatpush1.msra.mxu0 %v374
        %644 = vmatprep.subr.mxu0 0.0
        %645 = vmatpush1.msra.mxu0 %v375
        %646 = vmatprep.subr.mxu0 0.0
        %647 = vmatpush1.msra.mxu0 0.0
        %648 = vmatprep.subr.mxu0 0.0
        %649 = vmatpush1.msra.mxu0 0.0
        %650 = vmatprep.subr.mxu0 0.0
        %651 = vmatpush1.msra.mxu0 0.0
        %652 = vmatprep.subr.mxu0 0.0
        %653 = vmatpush1.msra.mxu0 0.0
        %654 = vmatprep.subr.mxu0 0.0
        %655 = vmatpush1.msra.mxu0 0.0
        %656 = vmatprep.subr.mxu0 0.0
        %657 = vmatpush1.msra.mxu0 0.0
        %658 = vmatprep.subr.mxu0 0.0
        %659 = vmatpush1.msra.mxu0 0.0
        %660 = vmatprep.subr.mxu0 0.0
        %661 = vmatpush1.msra.mxu0 0.0
        %662 = vmatprep.subr.mxu0 0.0
        %663 = vmatpush1.msra.mxu0 0.0
        %664 = vmatprep.subr.mxu0 0.0
        %665 = vmatpush1.msra.mxu0 0.0
        %666 = vmatprep.subr.mxu0 0.0
        %667 = vmatpush1.msra.mxu0 0.0
        %668 = vmatprep.subr.mxu0 0.0
        %669 = vmatpush1.msra.mxu0 0.0
        %670 = vmatprep.subr.mxu0 0.0
        %671 = vmatpush1.msra.mxu0 0.0
        %672 = vmatprep.subr.mxu0 0.0
        %673 = vmatpush1.msra.mxu0 0.0
        %674 = vmatprep.subr.mxu0 0.0
        %675 = vmatpush1.msra.mxu0 0.0
        %676 = vmatprep.subr.mxu0 0.0
        %677 = vmatpush1.msra.mxu0 0.0
        %678 = vmatprep.subr.mxu0 0.0
        %679 = vmatpush1.msra.mxu0 0.0
        %680 = vmatprep.subr.mxu0 0.0
        %681 = vmatpush1.msra.mxu0 0.0
        %682 = vmatprep.subr.mxu0 0.0
        %683 = vmatpush1.msra.mxu0 0.0
        %684 = vmatprep.subr.mxu0 0.0
        %685 = vmatpush1.msra.mxu0 0.0
        %686 = vmatprep.subr.mxu0 0.0
        %687 = vmatpush1.msra.mxu0 0.0
        %688 = vmatprep.subr.mxu0 0.0
        %689 = vmatpush1.msra.mxu0 0.0
        %690 = vmatprep.subr.mxu0 0.0
        %691 = vmatpush1.msra.mxu0 0.0
        %692 = vmatprep.subr.mxu0 0.0
        %693 = vmatpush1.msra.mxu0 0.0
        %694 = vmatprep.subr.mxu0 0.0
        %695 = vmatpush1.msra.mxu0 0.0
        %696 = vmatprep.subr.mxu0 0.0
        %697 = vmatpush1.msra.mxu0 0.0
        %698 = vmatprep.subr.mxu0 0.0
        %699 = vmatpush1.msra.mxu0 0.0
        %700 = vmatprep.subr.mxu0 0.0
        %701 = vmatpush1.msra.mxu0 0.0
        %702 = vmatprep.mubr.f32.mxu0 0.0
        %703 = vmatmul.mubr.f32.gmra.mrb[0].mxu0 %v591
        %v704 = vpop.f32.mrb[0].mxu0
        %v705 = vadd.f32 %v512, %v704
        %v706 = vpop.f32.mrb[0].mxu0
        %707 = vmatprep.mubr.f32.mxu0 0.0
        %708 = vmatmul.mubr.f32.gmra.mrb[0].mxu0 %v594
        %v709 = vpop.f32.mrb[0].mxu0
        %v710 = vadd.f32 %v517, %v709
        %v711 = vpop.f32.mrb[0].mxu0
        %712 = vmatprep.mubr.f32.mxu0 0.0
        %713 = vmatmul.mubr.f32.gmra.mrb[0].mxu0 %v597
        %v714 = vpop.f32.mrb[0].mxu0
        %v715 = vadd.f32 %v522, %v714
        %v716 = vpop.f32.mrb[0].mxu0
        %717 = vmatprep.mubr.f32.mxu0 0.0
        %718 = vmatmul.mubr.f32.gmra.mrb[0].mxu0 %v600
        %v719 = vpop.f32.mrb[0].mxu0
        %v720 = vadd.f32 %v527, %v719
        %v721 = vpop.f32.mrb[0].mxu0
        %722 = vmatprep.mubr.f32.mxu0 0.0
        %723 = vmatmul.mubr.f32.gmra.mrb[0].mxu0 %v603
        %v724 = vpop.f32.mrb[0].mxu0
        %v725 = vadd.f32 %v532, %v724
        %v726 = vpop.f32.mrb[0].mxu0
        %727 = vmatprep.mubr.f32.mxu0 0.0
        %728 = vmatmul.mubr.f32.gmra.mrb[0].mxu0 %v606
        %v729 = vpop.f32.mrb[0].mxu0
        %v730 = vadd.f32 %v537, %v729
        %v731 = vpop.f32.mrb[0].mxu0
        %732 = vmatprep.mubr.f32.mxu0 0.0
        %733 = vmatmul.mubr.f32.gmra.mrb[0].mxu0 %v609
        %v734 = vpop.f32.mrb[0].mxu0
        %v735 = vadd.f32 %v542, %v734
        %v736 = vpop.f32.mrb[0].mxu0
        %737 = vmatprep.mubr.f32.mxu0 0.0
        %738 = vmatmul.mubr.f32.gmra.mrb[0].mxu0 %v612
        %v739 = vpop.f32.mrb[0].mxu0
        %v740 = vadd.f32 %v547, %v739
        %v741 = vpop.f32.mrb[0].mxu0
        %742 = vmatprep.mubr.f32.mxu0 0.0
        %743 = vmatmul.mubr.f32.gmra.mrb[0].mxu0 %v615
        %v744 = vpop.f32.mrb[0].mxu0
        %v745 = vadd.f32 %v552, %v744
        %v746 = vpop.f32.mrb[0].mxu0
        %747 = vmatprep.mubr.f32.mxu0 0.0
        %748 = vmatmul.mubr.f32.gmra.mrb[0].mxu0 %v618
        %v749 = vpop.f32.mrb[0].mxu0
        %v750 = vadd.f32 %v557, %v749
        %v751 = vpop.f32.mrb[0].mxu0
        %752 = vmatprep.mubr.f32.mxu0 0.0
        %753 = vmatmul.mubr.f32.gmra.mrb[0].mxu0 %v621
        %v754 = vpop.f32.mrb[0].mxu0
        %v755 = vadd.f32 %v562, %v754
        %v756 = vpop.f32.mrb[0].mxu0
        %757 = vmatprep.mubr.f32.mxu0 0.0
        %758 = vmatmul.mubr.f32.gmra.mrb[0].mxu0 %v624
        %v759 = vpop.f32.mrb[0].mxu0
        %v760 = vadd.f32 %v567, %v759
        %v761 = vpop.f32.mrb[0].mxu0
        %762 = vmatprep.mubr.f32.mxu0 0.0
        %763 = vmatmul.mubr.f32.gmra.mrb[0].mxu0 %v627
        %v764 = vpop.f32.mrb[0].mxu0
        %v765 = vadd.f32 %v572, %v764
        %v766 = vpop.f32.mrb[0].mxu0
        %767 = vmatprep.mubr.f32.mxu0 0.0
        %768 = vmatmul.mubr.f32.gmra.mrb[0].mxu0 %v630
        %v769 = vpop.f32.mrb[0].mxu0
        %v770 = vadd.f32 %v577, %v769
        %v771 = vpop.f32.mrb[0].mxu0
        %772 = vmatprep.mubr.f32.mxu0 0.0
        %773 = vmatmul.mubr.f32.gmra.mrb[0].mxu0 %v633
        %v774 = vpop.f32.mrb[0].mxu0
        %v775 = vadd.f32 %v582, %v774
        %v776 = vpop.f32.mrb[0].mxu0
        %777 = vmatprep.mubr.f32.mxu0 0.0
        %778 = vmatmul.mubr.f32.gmra.mrb[0].mxu0 %v636
        %v779 = vpop.f32.mrb[0].mxu0
        %v780 = vadd.f32 %v587, %v779
        %v781 = vpop.f32.mrb[0].mxu0
        %782 = vdwg.mxu0
        %v783 = vld [vmem:[%s4] sm:$0x1]
        %v785 = vlaneseq
        %v786 = vshrl.u32 %v785, 7
        %v787 = vsub.s32 0, %v786
        %v788 = vrot.slane %v783, %v787
        %v790 = vadd.f32 %v705, %v788
        %v791 = vadd.f32 %v710, %v788
        %v792 = vadd.f32 %v715, %v788
        %v793 = vadd.f32 %v720, %v788
        %v794 = vadd.f32 %v725, %v788
        %v795 = vadd.f32 %v730, %v788
        %v796 = vadd.f32 %v735, %v788
        %v797 = vadd.f32 %v740, %v788
        %v798 = vadd.f32 %v745, %v788
        %v799 = vadd.f32 %v750, %v788
        %v800 = vadd.f32 %v755, %v788
        %v801 = vadd.f32 %v760, %v788
        %v802 = vadd.f32 %v765, %v788
        %v803 = vadd.f32 %v770, %v788
        %v804 = vadd.f32 %v775, %v788
        %v805 = vadd.f32 %v780, %v788
        %v806 = vmax.f32 %v790, 0.0
        %v807 = vmax.f32 %v791, 0.0
        %v808 = vmax.f32 %v792, 0.0
        %v809 = vmax.f32 %v793, 0.0
        %v810 = vmax.f32 %v794, 0.0
        %v811 = vmax.f32 %v795, 0.0
        %v812 = vmax.f32 %v796, 0.0
        %v813 = vmax.f32 %v797, 0.0
        %v814 = vmax.f32 %v798, 0.0
        %v815 = vmax.f32 %v799, 0.0
        %v816 = vmax.f32 %v800, 0.0
        %v817 = vmax.f32 %v801, 0.0
        %v818 = vmax.f32 %v802, 0.0
        %v819 = vmax.f32 %v803, 0.0
        %v820 = vmax.f32 %v804, 0.0
        %v821 = vmax.f32 %v805, 0.0
        %v822 = vld [vmem:[%s5] sm:$0xff]
        %v823 = vld [vmem:[%s5 + $0x8] sm:$0xff]
        %v824 = vld [vmem:[%s5 + $0x10] sm:$0xff]
        %v825 = vld [vmem:[%s5 + $0x18] sm:$0xff]
        %v826 = vld [vmem:[%s6] sm:$0x1]
        %v828 = vlaneseq
        %v829 = vshrl.u32 %v828, 7
        %v830 = vsub.s32 0, %v829
        %v831 = vrot.slane %v826, %v830
        %v834 = vsel %vm396, %v806, 0
        %v837 = vsel %vm396, %v807, 0
        %v840 = vsel %vm396, %v808, 0
        %v843 = vsel %vm396, %v809, 0
        %v846 = vsel %vm396, %v810, 0
        %v849 = vsel %vm396, %v811, 0
        %v852 = vsel %vm396, %v812, 0
        %v855 = vsel %vm396, %v813, 0
        %v858 = vsel %vm396, %v814, 0
        %v861 = vsel %vm396, %v815, 0
        %v864 = vsel %vm396, %v816, 0
        %v867 = vsel %vm396, %v817, 0
        %v870 = vsel %vm396, %v818, 0
        %v873 = vsel %vm396, %v819, 0
        %v876 = vsel %vm396, %v820, 0
        %v879 = vsel %vm396, %v821, 0
        %881 = vmatprep.subr.mxu0 0.0
        %882 = vmatpush1.msra.mxu0 %v822
        %883 = vmatprep.subr.mxu0 0.0
        %884 = vmatpush1.msra.mxu0 %v823
        %885 = vmatprep.subr.mxu0 0.0
        %886 = vmatpush1.msra.mxu0 %v824
        %887 = vmatprep.subr.mxu0 0.0
        %888 = vmatpush1.msra.mxu0 %v825
        %889 = vmatprep.subr.mxu0 0.0
        %890 = vmatpush1.msra.mxu0 0.0
        %891 = vmatprep.subr.mxu0 0.0
        %892 = vmatpush1.msra.mxu0 0.0
        %893 = vmatprep.subr.mxu0 0.0
        %894 = vmatpush1.msra.mxu0 0.0
        %895 = vmatprep.subr.mxu0 0.0
        %896 = vmatpush1.msra.mxu0 0.0
        %897 = vmatprep.subr.mxu0 0.0
        %898 = vmatpush1.msra.mxu0 0.0
        %899 = vmatprep.subr.mxu0 0.0
        %900 = vmatpush1.msra.mxu0 0.0
        %901 = vmatprep.subr.mxu0 0.0
        %902 = vmatpush1.msra.mxu0 0.0
        %903 = vmatprep.subr.mxu0 0.0
        %904 = vmatpush1.msra.mxu0 0.0
        %905 = vmatprep.subr.mxu0 0.0
        %906 = vmatpush1.msra.mxu0 0.0
        %907 = vmatprep.subr.mxu0 0.0
        %908 = vmatpush1.msra.mxu0 0.0
        %909 = vmatprep.subr.mxu0 0.0
        %910 = vmatpush1.msra.mxu0 0.0
        %911 = vmatprep.subr.mxu0 0.0
        %912 = vmatpush1.msra.mxu0 0.0
        %913 = vmatprep.subr.mxu0 0.0
        %914 = vmatpush1.msra.mxu0 0.0
        %915 = vmatprep.subr.mxu0 0.0
        %916 = vmatpush1.msra.mxu0 0.0
        %917 = vmatprep.subr.mxu0 0.0
        %918 = vmatpush1.msra.mxu0 0.0
        %919 = vmatprep.subr.mxu0 0.0
        %920 = vmatpush1.msra.mxu0 0.0
        %921 = vmatprep.subr.mxu0 0.0
        %922 = vmatpush1.msra.mxu0 0.0
        %923 = vmatprep.subr.mxu0 0.0
        %924 = vmatpush1.msra.mxu0 0.0
        %925 = vmatprep.subr.mxu0 0.0
        %926 = vmatpush1.msra.mxu0 0.0
        %927 = vmatprep.subr.mxu0 0.0
        %928 = vmatpush1.msra.mxu0 0.0
        %929 = vmatprep.subr.mxu0 0.0
        %930 = vmatpush1.msra.mxu0 0.0
        %931 = vmatprep.subr.mxu0 0.0
        %932 = vmatpush1.msra.mxu0 0.0
        %933 = vmatprep.subr.mxu0 0.0
        %934 = vmatpush1.msra.mxu0 0.0
        %935 = vmatprep.subr.mxu0 0.0
        %936 = vmatpush1.msra.mxu0 0.0
        %937 = vmatprep.subr.mxu0 0.0
        %938 = vmatpush1.msra.mxu0 0.0
        %939 = vmatprep.subr.mxu0 0.0
        %940 = vmatpush1.msra.mxu0 0.0
        %941 = vmatprep.subr.mxu0 0.0
        %942 = vmatpush1.msra.mxu0 0.0
        %943 = vmatprep.subr.mxu0 0.0
        %944 = vmatpush1.msra.mxu0 0.0
        %945 = vmatprep.mubr.f32.mxu0 0.0
        %946 = vmatmul.mubr.f32.gmra.mrb[0].mxu0 %v834
        %v947 = vpop.f32.mrb[0].mxu0
        %v948 = vadd.f32 %v831, %v947
        %v949 = vpop.f32.mrb[0].mxu0
        %950 = vmatprep.mubr.f32.mxu0 0.0
        %951 = vmatmul.mubr.f32.gmra.mrb[0].mxu0 %v837
        %v952 = vpop.f32.mrb[0].mxu0
        %v953 = vadd.f32 %v831, %v952
        %v954 = vpop.f32.mrb[0].mxu0
        %955 = vmatprep.mubr.f32.mxu0 0.0
        %956 = vmatmul.mubr.f32.gmra.mrb[0].mxu0 %v840
        %v957 = vpop.f32.mrb[0].mxu0
        %v958 = vadd.f32 %v831, %v957
        %v959 = vpop.f32.mrb[0].mxu0
        %960 = vmatprep.mubr.f32.mxu0 0.0
        %961 = vmatmul.mubr.f32.gmra.mrb[0].mxu0 %v843
        %v962 = vpop.f32.mrb[0].mxu0
        %v963 = vadd.f32 %v831, %v962
        %v964 = vpop.f32.mrb[0].mxu0
        %965 = vmatprep.mubr.f32.mxu0 0.0
        %966 = vmatmul.mubr.f32.gmra.mrb[0].mxu0 %v846
        %v967 = vpop.f32.mrb[0].mxu0
        %v968 = vadd.f32 %v831, %v967
        %v969 = vpop.f32.mrb[0].mxu0
        %970 = vmatprep.mubr.f32.mxu0 0.0
        %971 = vmatmul.mubr.f32.gmra.mrb[0].mxu0 %v849
        %v972 = vpop.f32.mrb[0].mxu0
        %v973 = vadd.f32 %v831, %v972
        %v974 = vpop.f32.mrb[0].mxu0
        %975 = vmatprep.mubr.f32.mxu0 0.0
        %976 = vmatmul.mubr.f32.gmra.mrb[0].mxu0 %v852
        %v977 = vpop.f32.mrb[0].mxu0
        %v978 = vadd.f32 %v831, %v977
        %v979 = vpop.f32.mrb[0].mxu0
        %980 = vmatprep.mubr.f32.mxu0 0.0
        %981 = vmatmul.mubr.f32.gmra.mrb[0].mxu0 %v855
        %v982 = vpop.f32.mrb[0].mxu0
        %v983 = vadd.f32 %v831, %v982
        %v984 = vpop.f32.mrb[0].mxu0
        %985 = vmatprep.mubr.f32.mxu0 0.0
        %986 = vmatmul.mubr.f32.gmra.mrb[0].mxu0 %v858
        %v987 = vpop.f32.mrb[0].mxu0
        %v988 = vadd.f32 %v831, %v987
        %v989 = vpop.f32.mrb[0].mxu0
        %990 = vmatprep.mubr.f32.mxu0 0.0
        %991 = vmatmul.mubr.f32.gmra.mrb[0].mxu0 %v861
        %v992 = vpop.f32.mrb[0].mxu0
        %v993 = vadd.f32 %v831, %v992
        %v994 = vpop.f32.mrb[0].mxu0
        %995 = vmatprep.mubr.f32.mxu0 0.0
        %996 = vmatmul.mubr.f32.gmra.mrb[0].mxu0 %v864
        %v997 = vpop.f32.mrb[0].mxu0
        %v998 = vadd.f32 %v831, %v997
        %v999 = vpop.f32.mrb[0].mxu0
        %1000 = vmatprep.mubr.f32.mxu0 0.0
        %1001 = vmatmul.mubr.f32.gmra.mrb[0].mxu0 %v867
        %v1002 = vpop.f32.mrb[0].mxu0
        %v1003 = vadd.f32 %v831, %v1002
        %v1004 = vpop.f32.mrb[0].mxu0
        %1005 = vmatprep.mubr.f32.mxu0 0.0
        %1006 = vmatmul.mubr.f32.gmra.mrb[0].mxu0 %v870
        %v1007 = vpop.f32.mrb[0].mxu0
        %v1008 = vadd.f32 %v831, %v1007
        %v1009 = vpop.f32.mrb[0].mxu0
        %1010 = vmatprep.mubr.f32.mxu0 0.0
        %1011 = vmatmul.mubr.f32.gmra.mrb[0].mxu0 %v873
        %v1012 = vpop.f32.mrb[0].mxu0
        %v1013 = vadd.f32 %v831, %v1012
        %v1014 = vpop.f32.mrb[0].mxu0
        %1015 = vmatprep.mubr.f32.mxu0 0.0
        %1016 = vmatmul.mubr.f32.gmra.mrb[0].mxu0 %v876
        %v1017 = vpop.f32.mrb[0].mxu0
        %v1018 = vadd.f32 %v831, %v1017
        %v1019 = vpop.f32.mrb[0].mxu0
        %1020 = vmatprep.mubr.f32.mxu0 0.0
        %1021 = vmatmul.mubr.f32.gmra.mrb[0].mxu0 %v879
        %v1022 = vpop.f32.mrb[0].mxu0
        %v1023 = vadd.f32 %v831, %v1022
        %v1024 = vpop.f32.mrb[0].mxu0
        %1025 = vdwg.mxu0
        %v1026 = vmax.f32 %v948, 0.0
        %v1027 = vmax.f32 %v953, 0.0
        %v1028 = vmax.f32 %v958, 0.0
        %v1029 = vmax.f32 %v963, 0.0
        %v1030 = vmax.f32 %v968, 0.0
        %v1031 = vmax.f32 %v973, 0.0
        %v1032 = vmax.f32 %v978, 0.0
        %v1033 = vmax.f32 %v983, 0.0
        %v1034 = vmax.f32 %v988, 0.0
        %v1035 = vmax.f32 %v993, 0.0
        %v1036 = vmax.f32 %v998, 0.0
        %v1037 = vmax.f32 %v1003, 0.0
        %v1038 = vmax.f32 %v1008, 0.0
        %v1039 = vmax.f32 %v1013, 0.0
        %v1040 = vmax.f32 %v1018, 0.0
        %v1041 = vmax.f32 %v1023, 0.0
        %v1042 = vld [vmem:[%s7] sm:$0x1]
        %v1043 = vld [vmem:[#allocation2] sm:$0x1]
        %1045 = vset.pattern.permute.xlu0 0
        %1046 = vperm.xlu0 %1045, %v1043
        %v1047 = vpop.permute.xlu0 %1046
        %v1049 = vlaneseq
        %v1050 = vshrl.u32 %v1049, 7
        %v1051 = vsub.s32 0, %v1050
        %v1052 = vrot.slane %v1047, %v1051
        %vm1053 = vcmask 130048
        %v1055 = vsel %vm1053, %v1042, 0
        %v1058 = vsel %vm1053, %v1026, 0
        %v1061 = vsel %vm1053, %v1027, 0
        %v1064 = vsel %vm1053, %v1028, 0
        %v1067 = vsel %vm1053, %v1029, 0
        %v1070 = vsel %vm1053, %v1030, 0
        %v1073 = vsel %vm1053, %v1031, 0
        %v1076 = vsel %vm1053, %v1032, 0
        %v1079 = vsel %vm1053, %v1033, 0
        %v1082 = vsel %vm1053, %v1034, 0
        %v1085 = vsel %vm1053, %v1035, 0
        %v1088 = vsel %vm1053, %v1036, 0
        %v1091 = vsel %vm1053, %v1037, 0
        %v1094 = vsel %vm1053, %v1038, 0
        %v1097 = vsel %vm1053, %v1039, 0
        %v1100 = vsel %vm1053, %v1040, 0
        %v1103 = vsel %vm1053, %v1041, 0
        %1105 = vmatprep.subr.mxu0 0.0
        %1106 = vmatpush1.xpose.msra.mxu0 %v1058
        %1107 = vmatprep.subr.mxu0 0.0
        %1108 = vmatpush1.xpose.msra.mxu0 %v1061
        %1109 = vmatprep.subr.mxu0 0.0
        %1110 = vmatpush1.xpose.msra.mxu0 %v1064
        %1111 = vmatprep.subr.mxu0 0.0
        %1112 = vmatpush1.xpose.msra.mxu0 %v1067
        %1113 = vmatprep.subr.mxu0 0.0
        %1114 = vmatpush1.xpose.msra.mxu0 %v1070
        %1115 = vmatprep.subr.mxu0 0.0
        %1116 = vmatpush1.xpose.msra.mxu0 %v1073
        %1117 = vmatprep.subr.mxu0 0.0
        %1118 = vmatpush1.xpose.msra.mxu0 %v1076
        %1119 = vmatprep.subr.mxu0 0.0
        %1120 = vmatpush1.xpose.msra.mxu0 %v1079
        %1121 = vmatprep.subr.mxu0 0.0
        %1122 = vmatpush1.xpose.msra.mxu0 %v1082
        %1123 = vmatprep.subr.mxu0 0.0
        %1124 = vmatpush1.xpose.msra.mxu0 %v1085
        %1125 = vmatprep.subr.mxu0 0.0
        %1126 = vmatpush1.xpose.msra.mxu0 %v1088
        %1127 = vmatprep.subr.mxu0 0.0
        %1128 = vmatpush1.xpose.msra.mxu0 %v1091
        %1129 = vmatprep.subr.mxu0 0.0
        %1130 = vmatpush1.xpose.msra.mxu0 %v1094
        %1131 = vmatprep.subr.mxu0 0.0
        %1132 = vmatpush1.xpose.msra.mxu0 %v1097
        %1133 = vmatprep.subr.mxu0 0.0
        %1134 = vmatpush1.xpose.msra.mxu0 %v1100
        %1135 = vmatprep.subr.mxu0 0.0
        %1136 = vmatpush1.xpose.msra.mxu0 %v1103
        %1137 = vmatprep.subr.mxu0 0.0
        %1138 = vmatpush1.xpose.msra.mxu0 0.0
        %1139 = vmatprep.subr.mxu0 0.0
        %1140 = vmatpush1.xpose.msra.mxu0 0.0
        %1141 = vmatprep.subr.mxu0 0.0
        %1142 = vmatpush1.xpose.msra.mxu0 0.0
        %1143 = vmatprep.subr.mxu0 0.0
        %1144 = vmatpush1.xpose.msra.mxu0 0.0
        %1145 = vmatprep.subr.mxu0 0.0
        %1146 = vmatpush1.xpose.msra.mxu0 0.0
        %1147 = vmatprep.subr.mxu0 0.0
        %1148 = vmatpush1.xpose.msra.mxu0 0.0
        %1149 = vmatprep.subr.mxu0 0.0
        %1150 = vmatpush1.xpose.msra.mxu0 0.0
        %1151 = vmatprep.subr.mxu0 0.0
        %1152 = vmatpush1.xpose.msra.mxu0 0.0
        %1153 = vmatprep.subr.mxu0 0.0
        %1154 = vmatpush1.xpose.msra.mxu0 0.0
        %1155 = vmatprep.subr.mxu0 0.0
        %1156 = vmatpush1.xpose.msra.mxu0 0.0
        %1157 = vmatprep.subr.mxu0 0.0
        %1158 = vmatpush1.xpose.msra.mxu0 0.0
        %1159 = vmatprep.subr.mxu0 0.0
        %1160 = vmatpush1.xpose.msra.mxu0 0.0
        %1161 = vmatprep.subr.mxu0 0.0
        %1162 = vmatpush1.xpose.msra.mxu0 0.0
        %1163 = vmatprep.subr.mxu0 0.0
        %1164 = vmatpush1.xpose.msra.mxu0 0.0
        %1165 = vmatprep.subr.mxu0 0.0
        %1166 = vmatpush1.xpose.msra.mxu0 0.0
        %1167 = vmatprep.subr.mxu0 0.0
        %1168 = vmatpush1.xpose.msra.mxu0 0.0
        %1169 = vmatprep.mubr.f32.mxu0 0.0
        %1170 = vmatmul.mubr.f32.gmra.mrb[0].mxu0 %v1055
        %v1171 = vpop.f32.mrb[0].mxu0
        %v1172 = vadd.f32 %v1052, %v1171
        %v1173 = vpop.f32.mrb[0].mxu0
        %1174 = vdwg.mxu0
        %1175 = vst [vmem:[%s343] sm:$0x1] %v1172
        %s1176 = sand.u32 %s232, 1
        %s1177 = scalar_lea.sflag [#allocation4], %s1176
        %s1178 = sand.u32 %s232, 1
        %s1179 = scalar_lea.vmem [#allocation3], %s1178
        // Predicated region
        $region57: #{tpu_custom_call.1} parent=55 // pred_check
          %p1180 = pneg %p242
        $region58: #{tpu_custom_call.1} parent=55 // pred_check_branch
          %1182 = sbr.rel (%p1180) target = $region60
        $region59: #{tpu_custom_call.1} parent=55 // pred_region
          %s1184 = ssub.s32 16, 16
          %1185 = vsyncadd %s1177, %s1184
          %s1186 = smul.addr %s25, 16
          %s1187 = scalar_lea.hbm %s9, %s1186
          %s1189 = sshll.u32 %s1179, 4
          %s1190 = int_to_ptr.vmem [resolvable:$true] %s1189
          %1192 = dma.vmem_to_hbm [thread:$0]  %s1190, 16, %s1187, %s1177
        $region60: #{tpu_custom_call.1} parent=55 // pred_fallthru
          _
      $region56: #{tpu_custom_call.1} parent=5 // pred_fallthru
        _
      %p1193 = scmp.le.s32.totalorder 2, %s20
      // Predicated region
      $region61: #{tpu_custom_call.1} parent=5 // pred_check
        %p1194 = pneg %p1193
      $region62: #{tpu_custom_call.1} parent=5 // pred_check_branch
        %1196 = sbr.rel (%p1194) target = $region64
      $region63: #{tpu_custom_call.1} parent=5 // pred_region
        %s1197 = ssub.s32 %s20, 2
        // Predicated region
        $region65: #{tpu_custom_call.1} parent=63 // pred_check
          %p1198 = pneg %p248
        $region66: #{tpu_custom_call.1} parent=63 // pred_check_branch
          %1200 = sbr.rel (%p1198) target = $region68
        $region67: #{tpu_custom_call.1} parent=63 // pred_region
          %s1201 = sand.u32 %s233, 1
          %s1202 = scalar_lea.sflag [#allocation4], %s1201
          %s1203 = sand.u32 %s233, 1
          %s1204 = scalar_lea.vmem [#allocation3], %s1203
          %1205 = dma.done %s1202, 16
        $region68: #{tpu_custom_call.1} parent=63 // pred_fallthru
          _
      $region64: #{tpu_custom_call.1} parent=5 // pred_fallthru
        _
    $region6: #{tpu_custom_call.1} parent=1 // loop_footer
      %s24 = sadd.s32 1, %s20
    $region7: #{tpu_custom_call.1} parent=1 // loop_footer_branch
      %19 = sbr.rel target = $region3
    $region8: #{tpu_custom_call.1} parent=1 // loop_exit
      _
    %1206 = vsyncpa [#allocation4], 1
    %s1207 = scalar_lea.sflag [#allocation4], 1
    %1208 = vsyncpa %s1207, 1

</llo_original>
